<compile_context>
chip_gen: v5e
topology: v5e:2x2
jax: 0.10.0
libtpu: 0.0.40
codegen_flags: <defaults>
</compile_context>

<pallas_src>
import functools

import jax
import jax.numpy as jnp
from jax.experimental import pallas as pl
from jax.experimental.pallas import tpu as pltpu

OUT_PAD = 128  # lane-dense padded logits width


# ----------------------- packed-constant row layout ------------------------- #
def _const_rows(E, H):
    """Row offsets of the single consolidated constant buffer (all 8-aligned)."""
    r_wih = 0                     # (2E, 8H) block-diag input->gates
    r_whh = r_wih + 2 * E         # (2H, 8H) block-diag hidden->gates
    r_bcat = r_whh + 2 * H        # (1, 8H)  combined gate biases (8-row section)
    r_wout = r_bcat + 8           # (2H, CP) merged output Linear weight
    r_bout = r_wout + 2 * H       # (1, CP)  output bias (8-row section)
    total = r_bout + 8
    return r_wih, r_whh, r_bcat, r_wout, r_bout, total


# ----------------------------- Pallas kernel ------------------------------- #
def lstm_classifier_kernel(xcat_ref,      # (S, 2E)   row t = [emb[t], emb[S-1-t]]
                           const_ref,     # (R, 128)  consolidated constants
                           o_ref,         # (S, 128)  padded logits (lane-dense)
                           *, S, E, H):
    G = 2 * H  # width of one packed gate group (fwd+bwd)
    r_wih, r_whh, r_bcat, r_wout, r_bout, _ = _const_rows(E, H)

    wih_blk = const_ref[r_wih:r_wih + 2 * E, :]        # (2E, 8H)
    whh_blk = const_ref[r_whh:r_whh + 2 * H, :]        # (2H, 8H)
    bcat = const_ref[r_bcat:r_bcat + 1, :]             # (1, 8H)
    wout = const_ref[r_wout:r_wout + 2 * H, :]         # (2H, 128)
    bout = const_ref[r_bout:r_bout + 1, :]             # (1, 128)

    # Phase 1: input projections for every timestep and both directions in one
    # lane-dense MXU matmul: (S, 2E) @ (2E, 8H) -> (S, 8H) (one f32 vreg at S=8).
    xproj = jnp.dot(xcat_ref[...], wih_blk,
                    preferred_element_type=jnp.float32) + bcat

    # Phase 2: fused bidirectional recurrence, fully unrolled, h/c carried in
    # vregs.  Gate layout: [i_f,i_b | f_f,f_b | g_f,g_b | o_f,o_b] (2H lanes each).
    def sigm(x):                                   # exact sigmoid via EUP tanh
        return 0.5 * (jnp.tanh(0.5 * x) + 1.0)

    h = jnp.zeros((1, G), jnp.float32)             # [h_fwd(H) | h_bwd(H)]
    c = jnp.zeros((1, G), jnp.float32)
    hs = []                                        # hidden states stay in vregs
    for t in range(S):
        gates = xproj[t:t + 1, :] + jnp.dot(h, whh_blk,
                                            preferred_element_type=jnp.float32)
        i = sigm(gates[:, 0 * G:1 * G])
        f = sigm(gates[:, 1 * G:2 * G])
        g = jnp.tanh(gates[:, 2 * G:3 * G])
        o = sigm(gates[:, 3 * G:4 * G])
        c = f * c + i * g
        h = o * jnp.tanh(c)
        hs.append(h)                               # no per-step VMEM store

    # Phase 3: time-align fwd/bwd halves with a hoisted lane mask (row t of hs
    # holds [h_f(t) | h_b(S-1-t)]), then ONE merged output matmul and ONE
    # unmasked lane-dense (8,128) store.
    lane = jax.lax.broadcasted_iota(jnp.int32, (1, G), 1)
    is_fwd = lane < H
    hcat = jnp.concatenate(
        [jnp.where(is_fwd, hs[t], hs[S - 1 - t]) for t in range(S)], axis=0)  # (S, 2H)
    o_ref[...] = jnp.dot(hcat, wout, preferred_element_type=jnp.float32) + bout


# --------------------------- one-time param packing ------------------------- #
def _interleave_gates(fwd, bwd, H):
    """fwd/bwd: (rows, 4H) with gate column blocks [i, f, g, o] ->
    (rows, 8H) with columns [i_f, i_b, f_f, f_b, g_f, g_b, o_f, o_b]."""
    cols = []
    for g in range(4):
        cols.append(fwd[:, g * H:(g + 1) * H])
        cols.append(bwd[:, g * H:(g + 1) * H])
    return jnp.concatenate(cols, axis=1)


def pack_params(params, out_pad=OUT_PAD):
    """Done ONCE outside the per-call path: transposes, gate permutation,
    block-diagonal packing, bias combining, merged output weight, and
    consolidation of every constant into one lane-dense (rows, 128) buffer."""
    f32 = lambda a: jnp.asarray(a, jnp.float32)
    H = params["whh_f"].shape[1]
    E = params["wih_f"].shape[1]
    C = params["wout"].shape[0]
    assert 8 * H == 128, "packed gate width must be exactly one 128-lane vreg"
    assert (2 * E) % 8 == 0 and (2 * H) % 8 == 0, "8-aligned row sections"
    assert C <= out_pad

    wih_f_T = f32(params["wih_f"]).T        # (E, 4H)
    wih_b_T = f32(params["wih_b"]).T
    whh_f_T = f32(params["whh_f"]).T        # (H, 4H)
    whh_b_T = f32(params["whh_b"]).T

    zE = jnp.zeros_like(wih_f_T)
    zH = jnp.zeros_like(whh_f_T)
    # rows 0:E driven by emb[t], rows E:2E by emb[S-1-t]
    wih_blk = jnp.concatenate([_interleave_gates(wih_f_T, zE, H),
                               _interleave_gates(zE, wih_b_T, H)], axis=0)   # (2E, 8H)
    # rows 0:H driven by h_fwd, rows H:2H by h_bwd
    whh_blk = jnp.concatenate([_interleave_gates(whh_f_T, zH, H),
                               _interleave_gates(zH, whh_b_T, H)], axis=0)   # (2H, 8H)

    b_f = (f32(params["bih_f"]) + f32(params["bhh_f"])).reshape(1, 4 * H)
    b_b = (f32(params["bih_b"]) + f32(params["bhh_b"])).reshape(1, 4 * H)
    bcat = _interleave_gates(b_f, b_b, H)                                     # (1, 8H)

    # Merged output Linear: rows 0:H multiply h_fwd lanes, rows H:2H h_bwd lanes.
    wout_T = f32(params["wout"]).T                                            # (2H, C)
    wout_pad = jnp.zeros((2 * H, out_pad), jnp.float32).at[:, :C].set(wout_T)
    bout_pad = jnp.zeros((1, out_pad), jnp.float32).at[0, :C].set(f32(params["bout"]))

    # Consolidate into ONE constant buffer, every section 8-row aligned.
    r_wih, r_whh, r_bcat, r_wout, r_bout, total = _const_rows(E, H)
    bcat8 = jnp.zeros((8, out_pad), jnp.float32).at[0:1, :].set(bcat)
    bout8 = jnp.zeros((8, out_pad), jnp.float32).at[0:1, :].set(bout_pad)
    const = jnp.concatenate([wih_blk, whh_blk, bcat8, wout_pad, bout8], axis=0)
    assert const.shape == (total, out_pad)

    return {"embedding": f32(params["embedding"]), "const": const,
            "H": H, "E": E, "num_classes": C}


# ------------------------------ wrapper ------------------------------------ #
def lstm_classifier_forward(tokens, packed):
    # Embedding lookup is a gather; keep it as plain-JAX glue.
    emb = jnp.take(packed["embedding"], tokens, axis=0)            # (S, E)
    S, E = emb.shape
    H = packed["H"]
    C = packed["num_classes"]

    # Fused-step input: row t = [emb[t], emb[S-1-t]]  -> (S, 2E)
    xcat = jnp.concatenate([emb, emb[::-1]], axis=1)

    vmem = lambda: pl.BlockSpec(memory_space=pltpu.MemorySpace.VMEM)
    kernel = functools.partial(lstm_classifier_kernel, S=S, E=E, H=H)

    out_pad = pl.pallas_call(
        kernel,
        out_shape=jax.ShapeDtypeStruct((S, OUT_PAD), jnp.float32),
        in_specs=[vmem(), vmem()],      # per-call activations + one const buffer
        out_specs=vmem(),
    )(xcat, packed["const"])

    return out_pad[:, :C]


# --------------------------- JAX reference ---------------------------------- #
def lstm_classifier_ref(tokens, params):
    emb = jnp.take(params["embedding"], tokens, axis=0).astype(jnp.float32)

    def run_dir(xs, wih, whh, bih, bhh):
        H = whh.shape[1]

        def step(carry, xt):
            h, c = carry
            gates = xt @ wih.T + bih + h @ whh.T + bhh
            i, f, g, o = jnp.split(gates, 4)
            i, f, o = jax.nn.sigmoid(i), jax.nn.sigmoid(f), jax.nn.sigmoid(o)
            g = jnp.tanh(g)
            c = f * c + i * g
            h = o * jnp.tanh(c)
            return (h, c), h

        _, hs = jax.lax.scan(step, (jnp.zeros(H), jnp.zeros(H)), xs)
        return hs

    hf = run_dir(emb, params["wih_f"], params["whh_f"],
                 params["bih_f"], params["bhh_f"])
    hb = run_dir(emb[::-1], params["wih_b"], params["whh_b"],
                 params["bih_b"], params["bhh_b"])[::-1]
    hcat = jnp.concatenate([hf, hb], axis=1)
    return hcat @ params["wout"].T + params["bout"]


# ------------------------------- params ------------------------------------ #
def init_params(key, vocab_size, embedding_dim, lstm_dim, num_classes):
    H = lstm_dim // 2
    ks = jax.random.split(key, 12)
    u = lambda k, shape, bound: jax.random.uniform(
        k, shape, jnp.float32, -bound, bound)
    lstm_b = 1.0 / jnp.sqrt(H)
    lin_b = 1.0 / jnp.sqrt(lstm_dim)
    return {
        "embedding": jax.random.normal(ks[0], (vocab_size, embedding_dim),
                                       jnp.float32),
        "wih_f": u(ks[1], (4 * H, embedding_dim), lstm_b),
        "whh_f": u(ks[2], (4 * H, H), lstm_b),
        "bih_f": u(ks[3], (4 * H,), lstm_b),
        "bhh_f": u(ks[4], (4 * H,), lstm_b),
        "wih_b": u(ks[5], (4 * H, embedding_dim), lstm_b),
        "whh_b": u(ks[6], (4 * H, H), lstm_b),
        "bih_b": u(ks[7], (4 * H,), lstm_b),
        "bhh_b": u(ks[8], (4 * H,), lstm_b),
        "wout": u(ks[9], (num_classes, lstm_dim), lin_b),
        "bout": u(ks[10], (num_classes,), lin_b),
    }


if __name__ == "__main__":
    VOCAB, EMB, LSTM_DIM, CLASSES, SEQ = 50, 32, 32, 8, 8

    key = jax.random.PRNGKey(0)
    k_params, k_tok = jax.random.split(key)
    params = init_params(k_params, VOCAB, EMB, LSTM_DIM, CLASSES)
    tokens = jax.random.randint(k_tok, (SEQ,), 0, VOCAB, dtype=jnp.int32)

    packed = pack_params(params)                      # one-time weight packing
    logits = jax.block_until_ready(lstm_classifier_forward(tokens, packed))
    ref = lstm_classifier_ref(tokens, params)

    assert logits.shape == (SEQ, CLASSES)
    assert jnp.allclose(logits, ref, atol=1e-4, rtol=1e-4)
    print("KERNEL_OK")
</pallas_src>

<mosaic_0001>
module attributes {stable_mosaic.version = 11 : i64} {
  func.func @lstm_classifier_kernel(%arg0: memref<8x64xf32, #tpu.memory_space<vmem>>, %arg1: memref<144x128xf32, #tpu.memory_space<vmem>>, %arg2: memref<8x128xf32, #tpu.memory_space<vmem>>) attributes {dimension_semantics = [], scalar_prefetch = 0 : i64, scratch_operands = 0 : i64, tpu.core_type = #tpu.core_type<tc>} {
    %c0 = arith.constant 0 : index
    %c0_0 = arith.constant 0 : index
    %0 = vector.load %arg1[%c0, %c0_0] : memref<144x128xf32, #tpu.memory_space<vmem>>, vector<64x128xf32>
    %c64 = arith.constant 64 : index
    %c0_1 = arith.constant 0 : index
    %1 = vector.load %arg1[%c64, %c0_1] : memref<144x128xf32, #tpu.memory_space<vmem>>, vector<32x128xf32>
    %c96 = arith.constant 96 : index
    %c0_2 = arith.constant 0 : index
    %2 = vector.load %arg1[%c96, %c0_2] : memref<144x128xf32, #tpu.memory_space<vmem>>, vector<1x128xf32>
    %c104 = arith.constant 104 : index
    %c0_3 = arith.constant 0 : index
    %3 = vector.load %arg1[%c104, %c0_3] : memref<144x128xf32, #tpu.memory_space<vmem>>, vector<32x128xf32>
    %c136 = arith.constant 136 : index
    %c0_4 = arith.constant 0 : index
    %4 = vector.load %arg1[%c136, %c0_4] : memref<144x128xf32, #tpu.memory_space<vmem>>, vector<1x128xf32>
    %c0_5 = arith.constant 0 : index
    %c0_6 = arith.constant 0 : index
    %5 = vector.load %arg0[%c0_5, %c0_6] : memref<8x64xf32, #tpu.memory_space<vmem>>, vector<8x64xf32>
    %cst = arith.constant dense<0.000000e+00> : vector<8x128xf32>
    %6 = tpu.matmul %5, %0, %cst {dimension_numbers = #tpu.dot_dimension_numbers<[1], [0], [0], [1], [0, 0, 1, 1], [], []>} : vector<8x64xf32>, vector<64x128xf32>, vector<8x128xf32> -> vector<8x128xf32>
    %7 = vector.broadcast %2 : vector<1x128xf32> to vector<8x128xf32>
    %8 = arith.addf %6, %7 : vector<8x128xf32>
    %cst_7 = arith.constant 0.000000e+00 : f32
    %9 = vector.broadcast %cst_7 : f32 to vector<1x32xf32>
    %cst_8 = arith.constant 0.000000e+00 : f32
    %10 = vector.broadcast %cst_8 : f32 to vector<1x32xf32>
    %11 = vector.extract_strided_slice %8 {offsets = [0, 0], sizes = [1, 128], strides = [1, 1]} : vector<8x128xf32> to vector<1x128xf32>
    %cst_9 = arith.constant dense<0.000000e+00> : vector<1x128xf32>
    %12 = tpu.matmul %9, %1, %cst_9 {dimension_numbers = #tpu.dot_dimension_numbers<[1], [0], [0], [1], [0, 0, 1, 1], [], []>} : vector<1x32xf32>, vector<32x128xf32>, vector<1x128xf32> -> vector<1x128xf32>
    %13 = arith.addf %11, %12 : vector<1x128xf32>
    %14 = vector.extract_strided_slice %13 {offsets = [0, 0], sizes = [1, 32], strides = [1, 1]} : vector<1x128xf32> to vector<1x32xf32>
    %cst_10 = arith.constant 5.000000e-01 : f32
    %15 = vector.broadcast %cst_10 : f32 to vector<1x32xf32>
    %16 = arith.mulf %15, %14 : vector<1x32xf32>
    %17 = math.tanh %16 : vector<1x32xf32>
    %cst_11 = arith.constant 1.000000e+00 : f32
    %18 = vector.broadcast %cst_11 : f32 to vector<1x32xf32>
    %19 = arith.addf %17, %18 : vector<1x32xf32>
    %cst_12 = arith.constant 5.000000e-01 : f32
    %20 = vector.broadcast %cst_12 : f32 to vector<1x32xf32>
    %21 = arith.mulf %20, %19 : vector<1x32xf32>
    %22 = vector.extract_strided_slice %13 {offsets = [0, 32], sizes = [1, 32], strides = [1, 1]} : vector<1x128xf32> to vector<1x32xf32>
    %cst_13 = arith.constant 5.000000e-01 : f32
    %23 = vector.broadcast %cst_13 : f32 to vector<1x32xf32>
    %24 = arith.mulf %23, %22 : vector<1x32xf32>
    %25 = math.tanh %24 : vector<1x32xf32>
    %cst_14 = arith.constant 1.000000e+00 : f32
    %26 = vector.broadcast %cst_14 : f32 to vector<1x32xf32>
    %27 = arith.addf %25, %26 : vector<1x32xf32>
    %cst_15 = arith.constant 5.000000e-01 : f32
    %28 = vector.broadcast %cst_15 : f32 to vector<1x32xf32>
    %29 = arith.mulf %28, %27 : vector<1x32xf32>
    %30 = vector.extract_strided_slice %13 {offsets = [0, 64], sizes = [1, 32], strides = [1, 1]} : vector<1x128xf32> to vector<1x32xf32>
    %31 = math.tanh %30 : vector<1x32xf32>
    %32 = vector.extract_strided_slice %13 {offsets = [0, 96], sizes = [1, 32], strides = [1, 1]} : vector<1x128xf32> to vector<1x32xf32>
    %cst_16 = arith.constant 5.000000e-01 : f32
    %33 = vector.broadcast %cst_16 : f32 to vector<1x32xf32>
    %34 = arith.mulf %33, %32 : vector<1x32xf32>
    %35 = math.tanh %34 : vector<1x32xf32>
    %cst_17 = arith.constant 1.000000e+00 : f32
    %36 = vector.broadcast %cst_17 : f32 to vector<1x32xf32>
    %37 = arith.addf %35, %36 : vector<1x32xf32>
    %cst_18 = arith.constant 5.000000e-01 : f32
    %38 = vector.broadcast %cst_18 : f32 to vector<1x32xf32>
    %39 = arith.mulf %38, %37 : vector<1x32xf32>
    %40 = arith.mulf %29, %10 : vector<1x32xf32>
    %41 = arith.mulf %21, %31 : vector<1x32xf32>
    %42 = arith.addf %40, %41 : vector<1x32xf32>
    %43 = math.tanh %42 : vector<1x32xf32>
    %44 = arith.mulf %39, %43 : vector<1x32xf32>
    %45 = vector.extract_strided_slice %8 {offsets = [1, 0], sizes = [1, 128], strides = [1, 1]} : vector<8x128xf32> to vector<1x128xf32>
    %cst_19 = arith.constant dense<0.000000e+00> : vector<1x128xf32>
    %46 = tpu.matmul %44, %1, %cst_19 {dimension_numbers = #tpu.dot_dimension_numbers<[1], [0], [0], [1], [0, 0, 1, 1], [], []>} : vector<1x32xf32>, vector<32x128xf32>, vector<1x128xf32> -> vector<1x128xf32>
    %47 = arith.addf %45, %46 : vector<1x128xf32>
    %48 = vector.extract_strided_slice %47 {offsets = [0, 0], sizes = [1, 32], strides = [1, 1]} : vector<1x128xf32> to vector<1x32xf32>
    %cst_20 = arith.constant 5.000000e-01 : f32
    %49 = vector.broadcast %cst_20 : f32 to vector<1x32xf32>
    %50 = arith.mulf %49, %48 : vector<1x32xf32>
    %51 = math.tanh %50 : vector<1x32xf32>
    %cst_21 = arith.constant 1.000000e+00 : f32
    %52 = vector.broadcast %cst_21 : f32 to vector<1x32xf32>
    %53 = arith.addf %51, %52 : vector<1x32xf32>
    %cst_22 = arith.constant 5.000000e-01 : f32
    %54 = vector.broadcast %cst_22 : f32 to vector<1x32xf32>
    %55 = arith.mulf %54, %53 : vector<1x32xf32>
    %56 = vector.extract_strided_slice %47 {offsets = [0, 32], sizes = [1, 32], strides = [1, 1]} : vector<1x128xf32> to vector<1x32xf32>
    %cst_23 = arith.constant 5.000000e-01 : f32
    %57 = vector.broadcast %cst_23 : f32 to vector<1x32xf32>
    %58 = arith.mulf %57, %56 : vector<1x32xf32>
    %59 = math.tanh %58 : vector<1x32xf32>
    %cst_24 = arith.constant 1.000000e+00 : f32
    %60 = vector.broadcast %cst_24 : f32 to vector<1x32xf32>
    %61 = arith.addf %59, %60 : vector<1x32xf32>
    %cst_25 = arith.constant 5.000000e-01 : f32
    %62 = vector.broadcast %cst_25 : f32 to vector<1x32xf32>
    %63 = arith.mulf %62, %61 : vector<1x32xf32>
    %64 = vector.extract_strided_slice %47 {offsets = [0, 64], sizes = [1, 32], strides = [1, 1]} : vector<1x128xf32> to vector<1x32xf32>
    %65 = math.tanh %64 : vector<1x32xf32>
    %66 = vector.extract_strided_slice %47 {offsets = [0, 96], sizes = [1, 32], strides = [1, 1]} : vector<1x128xf32> to vector<1x32xf32>
    %cst_26 = arith.constant 5.000000e-01 : f32
    %67 = vector.broadcast %cst_26 : f32 to vector<1x32xf32>
    %68 = arith.mulf %67, %66 : vector<1x32xf32>
    %69 = math.tanh %68 : vector<1x32xf32>
    %cst_27 = arith.constant 1.000000e+00 : f32
    %70 = vector.broadcast %cst_27 : f32 to vector<1x32xf32>
    %71 = arith.addf %69, %70 : vector<1x32xf32>
    %cst_28 = arith.constant 5.000000e-01 : f32
    %72 = vector.broadcast %cst_28 : f32 to vector<1x32xf32>
    %73 = arith.mulf %72, %71 : vector<1x32xf32>
    %74 = arith.mulf %63, %42 : vector<1x32xf32>
    %75 = arith.mulf %55, %65 : vector<1x32xf32>
    %76 = arith.addf %74, %75 : vector<1x32xf32>
    %77 = math.tanh %76 : vector<1x32xf32>
    %78 = arith.mulf %73, %77 : vector<1x32xf32>
    %79 = vector.extract_strided_slice %8 {offsets = [2, 0], sizes = [1, 128], strides = [1, 1]} : vector<8x128xf32> to vector<1x128xf32>
    %cst_29 = arith.constant dense<0.000000e+00> : vector<1x128xf32>
    %80 = tpu.matmul %78, %1, %cst_29 {dimension_numbers = #tpu.dot_dimension_numbers<[1], [0], [0], [1], [0, 0, 1, 1], [], []>} : vector<1x32xf32>, vector<32x128xf32>, vector<1x128xf32> -> vector<1x128xf32>
    %81 = arith.addf %79, %80 : vector<1x128xf32>
    %82 = vector.extract_strided_slice %81 {offsets = [0, 0], sizes = [1, 32], strides = [1, 1]} : vector<1x128xf32> to vector<1x32xf32>
    %cst_30 = arith.constant 5.000000e-01 : f32
    %83 = vector.broadcast %cst_30 : f32 to vector<1x32xf32>
    %84 = arith.mulf %83, %82 : vector<1x32xf32>
    %85 = math.tanh %84 : vector<1x32xf32>
    %cst_31 = arith.constant 1.000000e+00 : f32
    %86 = vector.broadcast %cst_31 : f32 to vector<1x32xf32>
    %87 = arith.addf %85, %86 : vector<1x32xf32>
    %cst_32 = arith.constant 5.000000e-01 : f32
    %88 = vector.broadcast %cst_32 : f32 to vector<1x32xf32>
    %89 = arith.mulf %88, %87 : vector<1x32xf32>
    %90 = vector.extract_strided_slice %81 {offsets = [0, 32], sizes = [1, 32], strides = [1, 1]} : vector<1x128xf32> to vector<1x32xf32>
    %cst_33 = arith.constant 5.000000e-01 : f32
    %91 = vector.broadcast %cst_33 : f32 to vector<1x32xf32>
    %92 = arith.mulf %91, %90 : vector<1x32xf32>
    %93 = math.tanh %92 : vector<1x32xf32>
    %cst_34 = arith.constant 1.000000e+00 : f32
    %94 = vector.broadcast %cst_34 : f32 to vector<1x32xf32>
    %95 = arith.addf %93, %94 : vector<1x32xf32>
    %cst_35 = arith.constant 5.000000e-01 : f32
    %96 = vector.broadcast %cst_35 : f32 to vector<1x32xf32>
    %97 = arith.mulf %96, %95 : vector<1x32xf32>
    %98 = vector.extract_strided_slice %81 {offsets = [0, 64], sizes = [1, 32], strides = [1, 1]} : vector<1x128xf32> to vector<1x32xf32>
    %99 = math.tanh %98 : vector<1x32xf32>
    %100 = vector.extract_strided_slice %81 {offsets = [0, 96], sizes = [1, 32], strides = [1, 1]} : vector<1x128xf32> to vector<1x32xf32>
    %cst_36 = arith.constant 5.000000e-01 : f32
    %101 = vector.broadcast %cst_36 : f32 to vector<1x32xf32>
    %102 = arith.mulf %101, %100 : vector<1x32xf32>
    %103 = math.tanh %102 : vector<1x32xf32>
    %cst_37 = arith.constant 1.000000e+00 : f32
    %104 = vector.broadcast %cst_37 : f32 to vector<1x32xf32>
    %105 = arith.addf %103, %104 : vector<1x32xf32>
    %cst_38 = arith.constant 5.000000e-01 : f32
    %106 = vector.broadcast %cst_38 : f32 to vector<1x32xf32>
    %107 = arith.mulf %106, %105 : vector<1x32xf32>
    %108 = arith.mulf %97, %76 : vector<1x32xf32>
    %109 = arith.mulf %89, %99 : vector<1x32xf32>
    %110 = arith.addf %108, %109 : vector<1x32xf32>
    %111 = math.tanh %110 : vector<1x32xf32>
    %112 = arith.mulf %107, %111 : vector<1x32xf32>
    %113 = vector.extract_strided_slice %8 {offsets = [3, 0], sizes = [1, 128], strides = [1, 1]} : vector<8x128xf32> to vector<1x128xf32>
    %cst_39 = arith.constant dense<0.000000e+00> : vector<1x128xf32>
    %114 = tpu.matmul %112, %1, %cst_39 {dimension_numbers = #tpu.dot_dimension_numbers<[1], [0], [0], [1], [0, 0, 1, 1], [], []>} : vector<1x32xf32>, vector<32x128xf32>, vector<1x128xf32> -> vector<1x128xf32>
    %115 = arith.addf %113, %114 : vector<1x128xf32>
    %116 = vector.extract_strided_slice %115 {offsets = [0, 0], sizes = [1, 32], strides = [1, 1]} : vector<1x128xf32> to vector<1x32xf32>
    %cst_40 = arith.constant 5.000000e-01 : f32
    %117 = vector.broadcast %cst_40 : f32 to vector<1x32xf32>
    %118 = arith.mulf %117, %116 : vector<1x32xf32>
    %119 = math.tanh %118 : vector<1x32xf32>
    %cst_41 = arith.constant 1.000000e+00 : f32
    %120 = vector.broadcast %cst_41 : f32 to vector<1x32xf32>
    %121 = arith.addf %119, %120 : vector<1x32xf32>
    %cst_42 = arith.constant 5.000000e-01 : f32
    %122 = vector.broadcast %cst_42 : f32 to vector<1x32xf32>
    %123 = arith.mulf %122, %121 : vector<1x32xf32>
    %124 = vector.extract_strided_slice %115 {offsets = [0, 32], sizes = [1, 32], strides = [1, 1]} : vector<1x128xf32> to vector<1x32xf32>
    %cst_43 = arith.constant 5.000000e-01 : f32
    %125 = vector.broadcast %cst_43 : f32 to vector<1x32xf32>
    %126 = arith.mulf %125, %124 : vector<1x32xf32>
    %127 = math.tanh %126 : vector<1x32xf32>
    %cst_44 = arith.constant 1.000000e+00 : f32
    %128 = vector.broadcast %cst_44 : f32 to vector<1x32xf32>
    %129 = arith.addf %127, %128 : vector<1x32xf32>
    %cst_45 = arith.constant 5.000000e-01 : f32
    %130 = vector.broadcast %cst_45 : f32 to vector<1x32xf32>
    %131 = arith.mulf %130, %129 : vector<1x32xf32>
    %132 = vector.extract_strided_slice %115 {offsets = [0, 64], sizes = [1, 32], strides = [1, 1]} : vector<1x128xf32> to vector<1x32xf32>
    %133 = math.tanh %132 : vector<1x32xf32>
    %134 = vector.extract_strided_slice %115 {offsets = [0, 96], sizes = [1, 32], strides = [1, 1]} : vector<1x128xf32> to vector<1x32xf32>
    %cst_46 = arith.constant 5.000000e-01 : f32
    %135 = vector.broadcast %cst_46 : f32 to vector<1x32xf32>
    %136 = arith.mulf %135, %134 : vector<1x32xf32>
    %137 = math.tanh %136 : vector<1x32xf32>
    %cst_47 = arith.constant 1.000000e+00 : f32
    %138 = vector.broadcast %cst_47 : f32 to vector<1x32xf32>
    %139 = arith.addf %137, %138 : vector<1x32xf32>
    %cst_48 = arith.constant 5.000000e-01 : f32
    %140 = vector.broadcast %cst_48 : f32 to vector<1x32xf32>
    %141 = arith.mulf %140, %139 : vector<1x32xf32>
    %142 = arith.mulf %131, %110 : vector<1x32xf32>
    %143 = arith.mulf %123, %133 : vector<1x32xf32>
    %144 = arith.addf %142, %143 : vector<1x32xf32>
    %145 = math.tanh %144 : vector<1x32xf32>
    %146 = arith.mulf %141, %145 : vector<1x32xf32>
    %147 = vector.extract_strided_slice %8 {offsets = [4, 0], sizes = [1, 128], strides = [1, 1]} : vector<8x128xf32> to vector<1x128xf32>
    %cst_49 = arith.constant dense<0.000000e+00> : vector<1x128xf32>
    %148 = tpu.matmul %146, %1, %cst_49 {dimension_numbers = #tpu.dot_dimension_numbers<[1], [0], [0], [1], [0, 0, 1, 1], [], []>} : vector<1x32xf32>, vector<32x128xf32>, vector<1x128xf32> -> vector<1x128xf32>
    %149 = arith.addf %147, %148 : vector<1x128xf32>
    %150 = vector.extract_strided_slice %149 {offsets = [0, 0], sizes = [1, 32], strides = [1, 1]} : vector<1x128xf32> to vector<1x32xf32>
    %cst_50 = arith.constant 5.000000e-01 : f32
    %151 = vector.broadcast %cst_50 : f32 to vector<1x32xf32>
    %152 = arith.mulf %151, %150 : vector<1x32xf32>
    %153 = math.tanh %152 : vector<1x32xf32>
    %cst_51 = arith.constant 1.000000e+00 : f32
    %154 = vector.broadcast %cst_51 : f32 to vector<1x32xf32>
    %155 = arith.addf %153, %154 : vector<1x32xf32>
    %cst_52 = arith.constant 5.000000e-01 : f32
    %156 = vector.broadcast %cst_52 : f32 to vector<1x32xf32>
    %157 = arith.mulf %156, %155 : vector<1x32xf32>
    %158 = vector.extract_strided_slice %149 {offsets = [0, 32], sizes = [1, 32], strides = [1, 1]} : vector<1x128xf32> to vector<1x32xf32>
    %cst_53 = arith.constant 5.000000e-01 : f32
    %159 = vector.broadcast %cst_53 : f32 to vector<1x32xf32>
    %160 = arith.mulf %159, %158 : vector<1x32xf32>
    %161 = math.tanh %160 : vector<1x32xf32>
    %cst_54 = arith.constant 1.000000e+00 : f32
    %162 = vector.broadcast %cst_54 : f32 to vector<1x32xf32>
    %163 = arith.addf %161, %162 : vector<1x32xf32>
    %cst_55 = arith.constant 5.000000e-01 : f32
    %164 = vector.broadcast %cst_55 : f32 to vector<1x32xf32>
    %165 = arith.mulf %164, %163 : vector<1x32xf32>
    %166 = vector.extract_strided_slice %149 {offsets = [0, 64], sizes = [1, 32], strides = [1, 1]} : vector<1x128xf32> to vector<1x32xf32>
    %167 = math.tanh %166 : vector<1x32xf32>
    %168 = vector.extract_strided_slice %149 {offsets = [0, 96], sizes = [1, 32], strides = [1, 1]} : vector<1x128xf32> to vector<1x32xf32>
    %cst_56 = arith.constant 5.000000e-01 : f32
    %169 = vector.broadcast %cst_56 : f32 to vector<1x32xf32>
    %170 = arith.mulf %169, %168 : vector<1x32xf32>
    %171 = math.tanh %170 : vector<1x32xf32>
    %cst_57 = arith.constant 1.000000e+00 : f32
    %172 = vector.broadcast %cst_57 : f32 to vector<1x32xf32>
    %173 = arith.addf %171, %172 : vector<1x32xf32>
    %cst_58 = arith.constant 5.000000e-01 : f32
    %174 = vector.broadcast %cst_58 : f32 to vector<1x32xf32>
    %175 = arith.mulf %174, %173 : vector<1x32xf32>
    %176 = arith.mulf %165, %144 : vector<1x32xf32>
    %177 = arith.mulf %157, %167 : vector<1x32xf32>
    %178 = arith.addf %176, %177 : vector<1x32xf32>
    %179 = math.tanh %178 : vector<1x32xf32>
    %180 = arith.mulf %175, %179 : vector<1x32xf32>
    %181 = vector.extract_strided_slice %8 {offsets = [5, 0], sizes = [1, 128], strides = [1, 1]} : vector<8x128xf32> to vector<1x128xf32>
    %cst_59 = arith.constant dense<0.000000e+00> : vector<1x128xf32>
    %182 = tpu.matmul %180, %1, %cst_59 {dimension_numbers = #tpu.dot_dimension_numbers<[1], [0], [0], [1], [0, 0, 1, 1], [], []>} : vector<1x32xf32>, vector<32x128xf32>, vector<1x128xf32> -> vector<1x128xf32>
    %183 = arith.addf %181, %182 : vector<1x128xf32>
    %184 = vector.extract_strided_slice %183 {offsets = [0, 0], sizes = [1, 32], strides = [1, 1]} : vector<1x128xf32> to vector<1x32xf32>
    %cst_60 = arith.constant 5.000000e-01 : f32
    %185 = vector.broadcast %cst_60 : f32 to vector<1x32xf32>
    %186 = arith.mulf %185, %184 : vector<1x32xf32>
    %187 = math.tanh %186 : vector<1x32xf32>
    %cst_61 = arith.constant 1.000000e+00 : f32
    %188 = vector.broadcast %cst_61 : f32 to vector<1x32xf32>
    %189 = arith.addf %187, %188 : vector<1x32xf32>
    %cst_62 = arith.constant 5.000000e-01 : f32
    %190 = vector.broadcast %cst_62 : f32 to vector<1x32xf32>
    %191 = arith.mulf %190, %189 : vector<1x32xf32>
    %192 = vector.extract_strided_slice %183 {offsets = [0, 32], sizes = [1, 32], strides = [1, 1]} : vector<1x128xf32> to vector<1x32xf32>
    %cst_63 = arith.constant 5.000000e-01 : f32
    %193 = vector.broadcast %cst_63 : f32 to vector<1x32xf32>
    %194 = arith.mulf %193, %192 : vector<1x32xf32>
    %195 = math.tanh %194 : vector<1x32xf32>
    %cst_64 = arith.constant 1.000000e+00 : f32
    %196 = vector.broadcast %cst_64 : f32 to vector<1x32xf32>
    %197 = arith.addf %195, %196 : vector<1x32xf32>
    %cst_65 = arith.constant 5.000000e-01 : f32
    %198 = vector.broadcast %cst_65 : f32 to vector<1x32xf32>
    %199 = arith.mulf %198, %197 : vector<1x32xf32>
    %200 = vector.extract_strided_slice %183 {offsets = [0, 64], sizes = [1, 32], strides = [1, 1]} : vector<1x128xf32> to vector<1x32xf32>
    %201 = math.tanh %200 : vector<1x32xf32>
    %202 = vector.extract_strided_slice %183 {offsets = [0, 96], sizes = [1, 32], strides = [1, 1]} : vector<1x128xf32> to vector<1x32xf32>
    %cst_66 = arith.constant 5.000000e-01 : f32
    %203 = vector.broadcast %cst_66 : f32 to vector<1x32xf32>
    %204 = arith.mulf %203, %202 : vector<1x32xf32>
    %205 = math.tanh %204 : vector<1x32xf32>
    %cst_67 = arith.constant 1.000000e+00 : f32
    %206 = vector.broadcast %cst_67 : f32 to vector<1x32xf32>
    %207 = arith.addf %205, %206 : vector<1x32xf32>
    %cst_68 = arith.constant 5.000000e-01 : f32
    %208 = vector.broadcast %cst_68 : f32 to vector<1x32xf32>
    %209 = arith.mulf %208, %207 : vector<1x32xf32>
    %210 = arith.mulf %199, %178 : vector<1x32xf32>
    %211 = arith.mulf %191, %201 : vector<1x32xf32>
    %212 = arith.addf %210, %211 : vector<1x32xf32>
    %213 = math.tanh %212 : vector<1x32xf32>
    %214 = arith.mulf %209, %213 : vector<1x32xf32>
    %215 = vector.extract_strided_slice %8 {offsets = [6, 0], sizes = [1, 128], strides = [1, 1]} : vector<8x128xf32> to vector<1x128xf32>
    %cst_69 = arith.constant dense<0.000000e+00> : vector<1x128xf32>
    %216 = tpu.matmul %214, %1, %cst_69 {dimension_numbers = #tpu.dot_dimension_numbers<[1], [0], [0], [1], [0, 0, 1, 1], [], []>} : vector<1x32xf32>, vector<32x128xf32>, vector<1x128xf32> -> vector<1x128xf32>
    %217 = arith.addf %215, %216 : vector<1x128xf32>
    %218 = vector.extract_strided_slice %217 {offsets = [0, 0], sizes = [1, 32], strides = [1, 1]} : vector<1x128xf32> to vector<1x32xf32>
    %cst_70 = arith.constant 5.000000e-01 : f32
    %219 = vector.broadcast %cst_70 : f32 to vector<1x32xf32>
    %220 = arith.mulf %219, %218 : vector<1x32xf32>
    %221 = math.tanh %220 : vector<1x32xf32>
    %cst_71 = arith.constant 1.000000e+00 : f32
    %222 = vector.broadcast %cst_71 : f32 to vector<1x32xf32>
    %223 = arith.addf %221, %222 : vector<1x32xf32>
    %cst_72 = arith.constant 5.000000e-01 : f32
    %224 = vector.broadcast %cst_72 : f32 to vector<1x32xf32>
    %225 = arith.mulf %224, %223 : vector<1x32xf32>
    %226 = vector.extract_strided_slice %217 {offsets = [0, 32], sizes = [1, 32], strides = [1, 1]} : vector<1x128xf32> to vector<1x32xf32>
    %cst_73 = arith.constant 5.000000e-01 : f32
    %227 = vector.broadcast %cst_73 : f32 to vector<1x32xf32>
    %228 = arith.mulf %227, %226 : vector<1x32xf32>
    %229 = math.tanh %228 : vector<1x32xf32>
    %cst_74 = arith.constant 1.000000e+00 : f32
    %230 = vector.broadcast %cst_74 : f32 to vector<1x32xf32>
    %231 = arith.addf %229, %230 : vector<1x32xf32>
    %cst_75 = arith.constant 5.000000e-01 : f32
    %232 = vector.broadcast %cst_75 : f32 to vector<1x32xf32>
    %233 = arith.mulf %232, %231 : vector<1x32xf32>
    %234 = vector.extract_strided_slice %217 {offsets = [0, 64], sizes = [1, 32], strides = [1, 1]} : vector<1x128xf32> to vector<1x32xf32>
    %235 = math.tanh %234 : vector<1x32xf32>
    %236 = vector.extract_strided_slice %217 {offsets = [0, 96], sizes = [1, 32], strides = [1, 1]} : vector<1x128xf32> to vector<1x32xf32>
    %cst_76 = arith.constant 5.000000e-01 : f32
    %237 = vector.broadcast %cst_76 : f32 to vector<1x32xf32>
    %238 = arith.mulf %237, %236 : vector<1x32xf32>
    %239 = math.tanh %238 : vector<1x32xf32>
    %cst_77 = arith.constant 1.000000e+00 : f32
    %240 = vector.broadcast %cst_77 : f32 to vector<1x32xf32>
    %241 = arith.addf %239, %240 : vector<1x32xf32>
    %cst_78 = arith.constant 5.000000e-01 : f32
    %242 = vector.broadcast %cst_78 : f32 to vector<1x32xf32>
    %243 = arith.mulf %242, %241 : vector<1x32xf32>
    %244 = arith.mulf %233, %212 : vector<1x32xf32>
    %245 = arith.mulf %225, %235 : vector<1x32xf32>
    %246 = arith.addf %244, %245 : vector<1x32xf32>
    %247 = math.tanh %246 : vector<1x32xf32>
    %248 = arith.mulf %243, %247 : vector<1x32xf32>
    %249 = vector.extract_strided_slice %8 {offsets = [7, 0], sizes = [1, 128], strides = [1, 1]} : vector<8x128xf32> to vector<1x128xf32>
    %cst_79 = arith.constant dense<0.000000e+00> : vector<1x128xf32>
    %250 = tpu.matmul %248, %1, %cst_79 {dimension_numbers = #tpu.dot_dimension_numbers<[1], [0], [0], [1], [0, 0, 1, 1], [], []>} : vector<1x32xf32>, vector<32x128xf32>, vector<1x128xf32> -> vector<1x128xf32>
    %251 = arith.addf %249, %250 : vector<1x128xf32>
    %252 = vector.extract_strided_slice %251 {offsets = [0, 0], sizes = [1, 32], strides = [1, 1]} : vector<1x128xf32> to vector<1x32xf32>
    %cst_80 = arith.constant 5.000000e-01 : f32
    %253 = vector.broadcast %cst_80 : f32 to vector<1x32xf32>
    %254 = arith.mulf %253, %252 : vector<1x32xf32>
    %255 = math.tanh %254 : vector<1x32xf32>
    %cst_81 = arith.constant 1.000000e+00 : f32
    %256 = vector.broadcast %cst_81 : f32 to vector<1x32xf32>
    %257 = arith.addf %255, %256 : vector<1x32xf32>
    %cst_82 = arith.constant 5.000000e-01 : f32
    %258 = vector.broadcast %cst_82 : f32 to vector<1x32xf32>
    %259 = arith.mulf %258, %257 : vector<1x32xf32>
    %260 = vector.extract_strided_slice %251 {offsets = [0, 32], sizes = [1, 32], strides = [1, 1]} : vector<1x128xf32> to vector<1x32xf32>
    %cst_83 = arith.constant 5.000000e-01 : f32
    %261 = vector.broadcast %cst_83 : f32 to vector<1x32xf32>
    %262 = arith.mulf %261, %260 : vector<1x32xf32>
    %263 = math.tanh %262 : vector<1x32xf32>
    %cst_84 = arith.constant 1.000000e+00 : f32
    %264 = vector.broadcast %cst_84 : f32 to vector<1x32xf32>
    %265 = arith.addf %263, %264 : vector<1x32xf32>
    %cst_85 = arith.constant 5.000000e-01 : f32
    %266 = vector.broadcast %cst_85 : f32 to vector<1x32xf32>
    %267 = arith.mulf %266, %265 : vector<1x32xf32>
    %268 = vector.extract_strided_slice %251 {offsets = [0, 64], sizes = [1, 32], strides = [1, 1]} : vector<1x128xf32> to vector<1x32xf32>
    %269 = math.tanh %268 : vector<1x32xf32>
    %270 = vector.extract_strided_slice %251 {offsets = [0, 96], sizes = [1, 32], strides = [1, 1]} : vector<1x128xf32> to vector<1x32xf32>
    %cst_86 = arith.constant 5.000000e-01 : f32
    %271 = vector.broadcast %cst_86 : f32 to vector<1x32xf32>
    %272 = arith.mulf %271, %270 : vector<1x32xf32>
    %273 = math.tanh %272 : vector<1x32xf32>
    %cst_87 = arith.constant 1.000000e+00 : f32
    %274 = vector.broadcast %cst_87 : f32 to vector<1x32xf32>
    %275 = arith.addf %273, %274 : vector<1x32xf32>
    %cst_88 = arith.constant 5.000000e-01 : f32
    %276 = vector.broadcast %cst_88 : f32 to vector<1x32xf32>
    %277 = arith.mulf %276, %275 : vector<1x32xf32>
    %278 = arith.mulf %267, %246 : vector<1x32xf32>
    %279 = arith.mulf %259, %269 : vector<1x32xf32>
    %280 = arith.addf %278, %279 : vector<1x32xf32>
    %281 = math.tanh %280 : vector<1x32xf32>
    %282 = arith.mulf %277, %281 : vector<1x32xf32>
    %283 = tpu.iota {dimensions = array<i32: 1>} : vector<1x32xi32>
    %c16_i32 = arith.constant 16 : i32
    %284 = vector.broadcast %c16_i32 : i32 to vector<1x32xi32>
    %285 = arith.cmpi slt, %283, %284 : vector<1x32xi32>
    %286 = arith.select %285, %44, %282 : vector<1x32xi1>, vector<1x32xf32>
    %287 = arith.select %285, %78, %248 : vector<1x32xi1>, vector<1x32xf32>
    %288 = arith.select %285, %112, %214 : vector<1x32xi1>, vector<1x32xf32>
    %289 = arith.select %285, %146, %180 : vector<1x32xi1>, vector<1x32xf32>
    %290 = arith.select %285, %180, %146 : vector<1x32xi1>, vector<1x32xf32>
    %291 = arith.select %285, %214, %112 : vector<1x32xi1>, vector<1x32xf32>
    %292 = arith.select %285, %248, %78 : vector<1x32xi1>, vector<1x32xf32>
    %293 = arith.select %285, %282, %44 : vector<1x32xi1>, vector<1x32xf32>
    %294 = tpu.concatenate %286, %287, %288, %289, %290, %291, %292, %293 in 0 : vector<1x32xf32>, vector<1x32xf32>, vector<1x32xf32>, vector<1x32xf32>, vector<1x32xf32>, vector<1x32xf32>, vector<1x32xf32>, vector<1x32xf32> -> vector<8x32xf32>
    %cst_89 = arith.constant dense<0.000000e+00> : vector<8x128xf32>
    %295 = tpu.matmul %294, %3, %cst_89 {dimension_numbers = #tpu.dot_dimension_numbers<[1], [0], [0], [1], [0, 0, 1, 1], [], []>} : vector<8x32xf32>, vector<32x128xf32>, vector<8x128xf32> -> vector<8x128xf32>
    %296 = vector.broadcast %4 : vector<1x128xf32> to vector<8x128xf32>
    %297 = arith.addf %295, %296 : vector<8x128xf32>
    %c0_90 = arith.constant 0 : index
    %c0_91 = arith.constant 0 : index
    %298 = vector.load %arg2[%c0_90, %c0_91] : memref<8x128xf32, #tpu.memory_space<vmem>>, vector<8x128xf32>
    tpu.vector_store %arg2[%c0_90, %c0_91], %297 {strides = array<i32>} : memref<8x128xf32, #tpu.memory_space<vmem>>, vector<8x128xf32>,
    return
  }
}

</mosaic_0001>

<llo_original>
// kernel: tpu_custom_call.1
$region0: #{tpu_custom_call.1}
  #allocation0 [shape = 'u32[]', space=smem, size = 0x4, offset = 0x4, fixed_abs, tag = 'smem constant byte address 0x4 - core index']
  #allocation1 [shape = 'u32[72,128]{1,0:T(1,128)}', space=vmem, size = 0x9000, scoped, tag = 'internal scratch']
  %s0 = inlined_call_operand.hbm [shape: f32[8,64], index: 0, kind: input, shape index: {}]
  %s1 = inlined_call_operand.hbm [shape: f32[144,128], index: 1, kind: input, shape index: {}]
  %s2 = inlined_call_operand.hbm [shape: f32[8,128], index: 2, kind: output, shape index: {}]
  %s3 = sld [smem:[#allocation0]]
  $region26: #{tpu_custom_call.1} parent=0
    _
  %s5 = ssub.s32 1, %s3
  %s6 = scalar_select 0, %s5, %s3
  $region1: #{tpu_custom_call.1} parent=0
    #allocation2 [shape = 'u8[4096]{0}', space=vmem, size = 0x1000, scoped, tag = 'input window, operand 0, single buffered']
    #allocation3 [shape = 's32[1]{0}', space=sflag, size = 0x4, scoped, tag = 'scoped memory for tpu_custom_call.1']
    #allocation4 [shape = 's32[1]{0}', space=sflag, size = 0x4, scoped, tag = 'scoped memory for tpu_custom_call.1']
    #allocation5 [shape = 'u8[73728]{0}', space=vmem, size = 0x12000, scoped, tag = 'input window, operand 1, single buffered']
    #allocation6 [shape = 's32[1]{0}', space=sflag, size = 0x4, scoped, tag = 'scoped memory for tpu_custom_call.1']
    #allocation7 [shape = 'u8[4096]{0}', space=vmem, size = 0x1000, scoped, tag = 'output window, operand 0, single buffered']
    %7 = vsyncpa [#allocation3], 0
    %8 = vsyncpa [#allocation6], 0
    %9 = vsyncpa [#allocation4], 0
    // Predicated region
    $region2: #{tpu_custom_call.1} parent=1 // pred_check
      _
    $region3: #{tpu_custom_call.1} parent=1 // pred_check_branch
      %11 = sbr.rel (0) target = $region5
    $region4: #{tpu_custom_call.1} parent=1 // pred_region
      %13 = vsyncadd [#allocation3], 0
      %s15 = sshll.u32 %s0, 4
      %s16 = int_to_ptr.hbm [resolvable:$true] %s15
      %s17 = sshll.u32 [#allocation2], 4
      %s18 = int_to_ptr.vmem [resolvable:$true] %s17
      %20 = dma.hbm_to_vmem [thread:$0]  %s16, 128, %s18, [#allocation3]
    $region5: #{tpu_custom_call.1} parent=1 // pred_fallthru
      _
    // Predicated region
    $region6: #{tpu_custom_call.1} parent=1 // pred_check
      _
    $region7: #{tpu_custom_call.1} parent=1 // pred_check_branch
      %22 = sbr.rel (0) target = $region9
    $region8: #{tpu_custom_call.1} parent=1 // pred_region
      %24 = vsyncadd [#allocation6], 0
      %s25 = sshll.u32 %s1, 4
      %s26 = int_to_ptr.hbm [resolvable:$true] %s25
      %s27 = sshll.u32 [#allocation5], 4
      %s28 = int_to_ptr.vmem [resolvable:$true] %s27
      %33 = dma.hbm_to_vmem [thread:$0]  %s26, 2304, %s28, [#allocation6], 128, 128, 8
    $region9: #{tpu_custom_call.1} parent=1 // pred_fallthru
      _
    // Predicated region
    $region10: #{tpu_custom_call.1} parent=1 // pred_check
      _
    $region11: #{tpu_custom_call.1} parent=1 // pred_check_branch
      %35 = sbr.rel (0) target = $region13
    $region12: #{tpu_custom_call.1} parent=1 // pred_region
      %37 = dma.done [#allocation3], 128
    $region13: #{tpu_custom_call.1} parent=1 // pred_fallthru
      _
    // Predicated region
    $region14: #{tpu_custom_call.1} parent=1 // pred_check
      _
    $region15: #{tpu_custom_call.1} parent=1 // pred_check_branch
      %39 = sbr.rel (0) target = $region17
    $region16: #{tpu_custom_call.1} parent=1 // pred_region
      %41 = dma.done [#allocation6], 2304
    $region17: #{tpu_custom_call.1} parent=1 // pred_fallthru
      _
    %v42 = vld [vmem:[#allocation5] sm:$0xff]
    %v43 = vld [vmem:[#allocation5 + $0x8] sm:$0xff]
    %v44 = vld [vmem:[#allocation5 + $0x10] sm:$0xff]
    %v45 = vld [vmem:[#allocation5 + $0x18] sm:$0xff]
    %v46 = vld [vmem:[#allocation5 + $0x20] sm:$0xff]
    %v47 = vld [vmem:[#allocation5 + $0x28] sm:$0xff]
    %v48 = vld [vmem:[#allocation5 + $0x30] sm:$0xff]
    %v49 = vld [vmem:[#allocation5 + $0x38] sm:$0xff]
    %v50 = vld [vmem:[#allocation5 + $0x40] sm:$0xff]
    %v51 = vld [vmem:[#allocation5 + $0x48] sm:$0xff]
    %v52 = vld [vmem:[#allocation5 + $0x50] sm:$0xff]
    %v53 = vld [vmem:[#allocation5 + $0x58] sm:$0xff]
    %v54 = vld [vmem:[#allocation5 + $0x60] sm:$0x1]
    %v55 = vld [vmem:[#allocation5 + $0x68] sm:$0xff]
    %v56 = vld [vmem:[#allocation5 + $0x70] sm:$0xff]
    %v57 = vld [vmem:[#allocation5 + $0x78] sm:$0xff]
    %v58 = vld [vmem:[#allocation5 + $0x80] sm:$0xff]
    %v59 = vld [vmem:[#allocation5 + $0x88] sm:$0x1]
    %v60 = vld [vmem:[#allocation2] sm:$0xff]
    %v61 = vperm.slane %v54, 0
    %vm62 = vcmask 523264
    %v64 = vsel %vm62, %v60, 0
    %66 = vmatpush.msra.mxu0 0.0
    %67 = vmatpush.msra.mxu0 0.0
    %68 = vmatpush.msra.mxu0 0.0
    %69 = vmatpush.msra.mxu0 0.0
    %70 = vmatpush.msra.mxu0 0.0
    %71 = vmatpush.msra.mxu0 0.0
    %72 = vmatpush.msra.mxu0 0.0
    %73 = vmatpush.msra.mxu0 0.0
    %74 = vmatpush.msra.mxu0 %v49
    %75 = vmatpush.msra.mxu0 %v48
    %76 = vmatpush.msra.mxu0 %v47
    %77 = vmatpush.msra.mxu0 %v46
    %78 = vmatpush.msra.mxu0 %v45
    %79 = vmatpush.msra.mxu0 %v44
    %80 = vmatpush.msra.mxu0 %v43
    %81 = vmatpush.msra.mxu0 %v42
    %82 = vmatmul.f32.gmra.mxu0 %v64
    %v83 = vpop.f32.mrf.mxu0
    %v84 = vadd.f32 %v61, %v83
    %85 = vdwg.mxu0
    %vm86 = vcmask 261120
    %v88 = vsel %vm86, 0.0, 0
    %90 = vmatpush.msra.mxu0 0.0
    %91 = vmatpush.msra.mxu0 0.0
    %92 = vmatpush.msra.mxu0 0.0
    %93 = vmatpush.msra.mxu0 0.0
    %94 = vmatpush.msra.mxu0 0.0
    %95 = vmatpush.msra.mxu0 0.0
    %96 = vmatpush.msra.mxu0 0.0
    %97 = vmatpush.msra.mxu0 0.0
    %98 = vmatpush.msra.mxu0 0.0
    %99 = vmatpush.msra.mxu0 0.0
    %100 = vmatpush.msra.mxu0 0.0
    %101 = vmatpush.msra.mxu0 0.0
    %102 = vmatpush.msra.mxu0 %v53
    %103 = vmatpush.msra.mxu0 %v52
    %104 = vmatpush.msra.mxu0 %v51
    %105 = vmatpush.msra.mxu0 %v50
    %106 = vmatmul.f32.gmra.mxu0 %v88
    %v107 = vpop.f32.mrf.mxu0
    %v108 = vadd.f32 0.0, %v107
    %109 = vdwg.mxu0
    %v110 = vadd.f32 %v84, %v108
    %v111 = vmul.f32 %v110, 0.5
    %v112 = vtanh.pop %v111
    %v113 = vadd.f32 %v112, 1.0
    %v114 = vmul.f32 %v113, 0.5
    %v115 = vtanh.pop %v110
    %v116 = vmul.f32 %v114, 0.0
    %118 = vrot.lane.b32.xlu0 %v115, 64
    %v119 = vpop.permute.xlu0 %118
    %v121 = vmul.f32 %v114, %v119
    %123 = vrot.lane.b32.xlu0 %v121, 32
    %v124 = vpop.permute.xlu0 %123
    %v126 = vadd.f32 %v116, %v124
    %v127 = vtanh.pop %v126
    %129 = vrot.lane.b32.xlu0 %v127, 64
    %v130 = vpop.permute.xlu0 %129
    %v132 = vmul.f32 %v114, %v130
    %134 = vrot.lane.b32.xlu0 %v132, 32
    %v135 = vpop.permute.xlu0 %134
    %v136 = vsel %vm86, %v135, 0
    %138 = vmatpush.msra.mxu0 0.0
    %139 = vmatpush.msra.mxu0 0.0
    %140 = vmatpush.msra.mxu0 0.0
    %141 = vmatpush.msra.mxu0 0.0
    %142 = vmatpush.msra.mxu0 0.0
    %143 = vmatpush.msra.mxu0 0.0
    %144 = vmatpush.msra.mxu0 0.0
    %145 = vmatpush.msra.mxu0 0.0
    %146 = vmatpush.msra.mxu0 0.0
    %147 = vmatpush.msra.mxu0 0.0
    %148 = vmatpush.msra.mxu0 0.0
    %149 = vmatpush.msra.mxu0 0.0
    %150 = vmatpush.msra.mxu0 %v53
    %151 = vmatpush.msra.mxu0 %v52
    %152 = vmatpush.msra.mxu0 %v51
    %153 = vmatpush.msra.mxu0 %v50
    %154 = vmatmul.f32.gmra.mxu0 %v136
    %v155 = vpop.f32.mrf.mxu0
    %v156 = vadd.f32 0.0, %v155
    %157 = vdwg.mxu0
    %v159 = vrot.slane %v156, 7
    %v161 = vadd.f32 %v84, %v159
    %v162 = vmul.f32 %v161, 0.5
    %v163 = vtanh.pop %v162
    %v164 = vadd.f32 %v163, 1.0
    %v165 = vmul.f32 %v164, 0.5
    %v166 = vtanh.pop %v161
    %v168 = vrot.slane %v126, 7
    %v170 = vmul.f32 %v165, %v168
    %172 = vrot.lane.b32.xlu0 %v166, 64
    %v173 = vpop.permute.xlu0 %172
    %v175 = vmul.f32 %v165, %v173
    %177 = vrot.lane.b32.xlu0 %v175, 32
    %v178 = vpop.permute.xlu0 %177
    %v180 = vadd.f32 %v170, %v178
    %v181 = vtanh.pop %v180
    %183 = vrot.lane.b32.xlu0 %v181, 64
    %v184 = vpop.permute.xlu0 %183
    %v186 = vmul.f32 %v165, %v184
    %v188 = vrot.slane %v186, 1
    %189 = vrot.lane.b32.xlu0 %v188, 32
    %v190 = vpop.permute.xlu0 %189
    %v191 = vsel %vm86, %v190, 0
    %193 = vmatpush.msra.mxu0 0.0
    %194 = vmatpush.msra.mxu0 0.0
    %195 = vmatpush.msra.mxu0 0.0
    %196 = vmatpush.msra.mxu0 0.0
    %197 = vmatpush.msra.mxu0 0.0
    %198 = vmatpush.msra.mxu0 0.0
    %199 = vmatpush.msra.mxu0 0.0
    %200 = vmatpush.msra.mxu0 0.0
    %201 = vmatpush.msra.mxu0 0.0
    %202 = vmatpush.msra.mxu0 0.0
    %203 = vmatpush.msra.mxu0 0.0
    %204 = vmatpush.msra.mxu0 0.0
    %205 = vmatpush.msra.mxu0 %v53
    %206 = vmatpush.msra.mxu0 %v52
    %207 = vmatpush.msra.mxu0 %v51
    %208 = vmatpush.msra.mxu0 %v50
    %209 = vmatmul.f32.gmra.mxu0 %v191
    %v210 = vpop.f32.mrf.mxu0
    %v211 = vadd.f32 0.0, %v210
    %212 = vdwg.mxu0
    %v214 = vrot.slane %v211, 6
    %v216 = vadd.f32 %v84, %v214
    %v217 = vmul.f32 %v216, 0.5
    %v218 = vtanh.pop %v217
    %v219 = vadd.f32 %v218, 1.0
    %v220 = vmul.f32 %v219, 0.5
    %v221 = vtanh.pop %v216
    %v223 = vrot.slane %v180, 7
    %v225 = vmul.f32 %v220, %v223
    %227 = vrot.lane.b32.xlu0 %v221, 64
    %v228 = vpop.permute.xlu0 %227
    %v230 = vmul.f32 %v220, %v228
    %232 = vrot.lane.b32.xlu0 %v230, 32
    %v233 = vpop.permute.xlu0 %232
    %v235 = vadd.f32 %v225, %v233
    %v236 = vtanh.pop %v235
    %238 = vrot.lane.b32.xlu0 %v236, 64
    %v239 = vpop.permute.xlu0 %238
    %v241 = vmul.f32 %v220, %v239
    %v243 = vrot.slane %v241, 2
    %244 = vrot.lane.b32.xlu0 %v243, 32
    %v245 = vpop.permute.xlu0 %244
    %v246 = vsel %vm86, %v245, 0
    %248 = vmatpush.msra.mxu0 0.0
    %249 = vmatpush.msra.mxu0 0.0
    %250 = vmatpush.msra.mxu0 0.0
    %251 = vmatpush.msra.mxu0 0.0
    %252 = vmatpush.msra.mxu0 0.0
    %253 = vmatpush.msra.mxu0 0.0
    %254 = vmatpush.msra.mxu0 0.0
    %255 = vmatpush.msra.mxu0 0.0
    %256 = vmatpush.msra.mxu0 0.0
    %257 = vmatpush.msra.mxu0 0.0
    %258 = vmatpush.msra.mxu0 0.0
    %259 = vmatpush.msra.mxu0 0.0
    %260 = vmatpush.msra.mxu0 %v53
    %261 = vmatpush.msra.mxu0 %v52
    %262 = vmatpush.msra.mxu0 %v51
    %263 = vmatpush.msra.mxu0 %v50
    %264 = vmatmul.f32.gmra.mxu0 %v246
    %v265 = vpop.f32.mrf.mxu0
    %v266 = vadd.f32 0.0, %v265
    %267 = vdwg.mxu0
    %v269 = vrot.slane %v266, 5
    %v271 = vadd.f32 %v84, %v269
    %v272 = vmul.f32 %v271, 0.5
    %v273 = vtanh.pop %v272
    %v274 = vadd.f32 %v273, 1.0
    %v275 = vmul.f32 %v274, 0.5
    %v276 = vtanh.pop %v271
    %v278 = vrot.slane %v235, 7
    %v280 = vmul.f32 %v275, %v278
    %282 = vrot.lane.b32.xlu0 %v276, 64
    %v283 = vpop.permute.xlu0 %282
    %v285 = vmul.f32 %v275, %v283
    %287 = vrot.lane.b32.xlu0 %v285, 32
    %v288 = vpop.permute.xlu0 %287
    %v290 = vadd.f32 %v280, %v288
    %v291 = vtanh.pop %v290
    %293 = vrot.lane.b32.xlu0 %v291, 64
    %v294 = vpop.permute.xlu0 %293
    %v296 = vmul.f32 %v275, %v294
    %v298 = vrot.slane %v296, 3
    %299 = vrot.lane.b32.xlu0 %v298, 32
    %v300 = vpop.permute.xlu0 %299
    %v301 = vsel %vm86, %v300, 0
    %303 = vmatpush.msra.mxu0 0.0
    %304 = vmatpush.msra.mxu0 0.0
    %305 = vmatpush.msra.mxu0 0.0
    %306 = vmatpush.msra.mxu0 0.0
    %307 = vmatpush.msra.mxu0 0.0
    %308 = vmatpush.msra.mxu0 0.0
    %309 = vmatpush.msra.mxu0 0.0
    %310 = vmatpush.msra.mxu0 0.0
    %311 = vmatpush.msra.mxu0 0.0
    %312 = vmatpush.msra.mxu0 0.0
    %313 = vmatpush.msra.mxu0 0.0
    %314 = vmatpush.msra.mxu0 0.0
    %315 = vmatpush.msra.mxu0 %v53
    %316 = vmatpush.msra.mxu0 %v52
    %317 = vmatpush.msra.mxu0 %v51
    %318 = vmatpush.msra.mxu0 %v50
    %319 = vmatmul.f32.gmra.mxu0 %v301
    %v320 = vpop.f32.mrf.mxu0
    %v321 = vadd.f32 0.0, %v320
    %322 = vdwg.mxu0
    %v324 = vrot.slane %v321, 4
    %v326 = vadd.f32 %v84, %v324
    %v327 = vmul.f32 %v326, 0.5
    %v328 = vtanh.pop %v327
    %v329 = vadd.f32 %v328, 1.0
    %v330 = vmul.f32 %v329, 0.5
    %v331 = vtanh.pop %v326
    %v333 = vrot.slane %v290, 7
    %v335 = vmul.f32 %v330, %v333
    %337 = vrot.lane.b32.xlu0 %v331, 64
    %v338 = vpop.permute.xlu0 %337
    %v340 = vmul.f32 %v330, %v338
    %342 = vrot.lane.b32.xlu0 %v340, 32
    %v343 = vpop.permute.xlu0 %342
    %v345 = vadd.f32 %v335, %v343
    %v346 = vtanh.pop %v345
    %348 = vrot.lane.b32.xlu0 %v346, 64
    %v349 = vpop.permute.xlu0 %348
    %v351 = vmul.f32 %v330, %v349
    %v353 = vrot.slane %v351, 4
    %354 = vrot.lane.b32.xlu0 %v353, 32
    %v355 = vpop.permute.xlu0 %354
    %v356 = vsel %vm86, %v355, 0
    %358 = vmatpush.msra.mxu0 0.0
    %359 = vmatpush.msra.mxu0 0.0
    %360 = vmatpush.msra.mxu0 0.0
    %361 = vmatpush.msra.mxu0 0.0
    %362 = vmatpush.msra.mxu0 0.0
    %363 = vmatpush.msra.mxu0 0.0
    %364 = vmatpush.msra.mxu0 0.0
    %365 = vmatpush.msra.mxu0 0.0
    %366 = vmatpush.msra.mxu0 0.0
    %367 = vmatpush.msra.mxu0 0.0
    %368 = vmatpush.msra.mxu0 0.0
    %369 = vmatpush.msra.mxu0 0.0
    %370 = vmatpush.msra.mxu0 %v53
    %371 = vmatpush.msra.mxu0 %v52
    %372 = vmatpush.msra.mxu0 %v51
    %373 = vmatpush.msra.mxu0 %v50
    %374 = vmatmul.f32.gmra.mxu0 %v356
    %v375 = vpop.f32.mrf.mxu0
    %v376 = vadd.f32 0.0, %v375
    %377 = vdwg.mxu0
    %v379 = vrot.slane %v376, 3
    %v381 = vadd.f32 %v84, %v379
    %v382 = vmul.f32 %v381, 0.5
    %v383 = vtanh.pop %v382
    %v384 = vadd.f32 %v383, 1.0
    %v385 = vmul.f32 %v384, 0.5
    %v386 = vtanh.pop %v381
    %v388 = vrot.slane %v345, 7
    %v390 = vmul.f32 %v385, %v388
    %392 = vrot.lane.b32.xlu0 %v386, 64
    %v393 = vpop.permute.xlu0 %392
    %v395 = vmul.f32 %v385, %v393
    %397 = vrot.lane.b32.xlu0 %v395, 32
    %v398 = vpop.permute.xlu0 %397
    %v400 = vadd.f32 %v390, %v398
    %v401 = vtanh.pop %v400
    %403 = vrot.lane.b32.xlu0 %v401, 64
    %v404 = vpop.permute.xlu0 %403
    %v406 = vmul.f32 %v385, %v404
    %v408 = vrot.slane %v406, 5
    %409 = vrot.lane.b32.xlu0 %v408, 32
    %v410 = vpop.permute.xlu0 %409
    %v411 = vsel %vm86, %v410, 0
    %413 = vmatpush.msra.mxu0 0.0
    %414 = vmatpush.msra.mxu0 0.0
    %415 = vmatpush.msra.mxu0 0.0
    %416 = vmatpush.msra.mxu0 0.0
    %417 = vmatpush.msra.mxu0 0.0
    %418 = vmatpush.msra.mxu0 0.0
    %419 = vmatpush.msra.mxu0 0.0
    %420 = vmatpush.msra.mxu0 0.0
    %421 = vmatpush.msra.mxu0 0.0
    %422 = vmatpush.msra.mxu0 0.0
    %423 = vmatpush.msra.mxu0 0.0
    %424 = vmatpush.msra.mxu0 0.0
    %425 = vmatpush.msra.mxu0 %v53
    %426 = vmatpush.msra.mxu0 %v52
    %427 = vmatpush.msra.mxu0 %v51
    %428 = vmatpush.msra.mxu0 %v50
    %429 = vmatmul.f32.gmra.mxu0 %v411
    %v430 = vpop.f32.mrf.mxu0
    %v431 = vadd.f32 0.0, %v430
    %432 = vdwg.mxu0
    %v434 = vrot.slane %v431, 2
    %v436 = vadd.f32 %v84, %v434
    %v437 = vmul.f32 %v436, 0.5
    %v438 = vtanh.pop %v437
    %v439 = vadd.f32 %v438, 1.0
    %v440 = vmul.f32 %v439, 0.5
    %v441 = vtanh.pop %v436
    %v443 = vrot.slane %v400, 7
    %v445 = vmul.f32 %v440, %v443
    %447 = vrot.lane.b32.xlu0 %v441, 64
    %v448 = vpop.permute.xlu0 %447
    %v450 = vmul.f32 %v440, %v448
    %452 = vrot.lane.b32.xlu0 %v450, 32
    %v453 = vpop.permute.xlu0 %452
    %v455 = vadd.f32 %v445, %v453
    %v456 = vtanh.pop %v455
    %458 = vrot.lane.b32.xlu0 %v456, 64
    %v459 = vpop.permute.xlu0 %458
    %v461 = vmul.f32 %v440, %v459
    %v463 = vrot.slane %v461, 6
    %464 = vrot.lane.b32.xlu0 %v463, 32
    %v465 = vpop.permute.xlu0 %464
    %v466 = vsel %vm86, %v465, 0
    %468 = vmatpush.msra.mxu0 0.0
    %469 = vmatpush.msra.mxu0 0.0
    %470 = vmatpush.msra.mxu0 0.0
    %471 = vmatpush.msra.mxu0 0.0
    %472 = vmatpush.msra.mxu0 0.0
    %473 = vmatpush.msra.mxu0 0.0
    %474 = vmatpush.msra.mxu0 0.0
    %475 = vmatpush.msra.mxu0 0.0
    %476 = vmatpush.msra.mxu0 0.0
    %477 = vmatpush.msra.mxu0 0.0
    %478 = vmatpush.msra.mxu0 0.0
    %479 = vmatpush.msra.mxu0 0.0
    %480 = vmatpush.msra.mxu0 %v53
    %481 = vmatpush.msra.mxu0 %v52
    %482 = vmatpush.msra.mxu0 %v51
    %483 = vmatpush.msra.mxu0 %v50
    %484 = vmatmul.f32.gmra.mxu0 %v466
    %v485 = vpop.f32.mrf.mxu0
    %v486 = vadd.f32 0.0, %v485
    %487 = vdwg.mxu0
    %v489 = vrot.slane %v486, 1
    %v491 = vadd.f32 %v84, %v489
    %v492 = vmul.f32 %v491, 0.5
    %v493 = vtanh.pop %v492
    %v494 = vadd.f32 %v493, 1.0
    %v495 = vmul.f32 %v494, 0.5
    %v496 = vtanh.pop %v491
    %v498 = vrot.slane %v455, 7
    %v500 = vmul.f32 %v495, %v498
    %502 = vrot.lane.b32.xlu0 %v496, 64
    %v503 = vpop.permute.xlu0 %502
    %v505 = vmul.f32 %v495, %v503
    %507 = vrot.lane.b32.xlu0 %v505, 32
    %v508 = vpop.permute.xlu0 %507
    %v510 = vadd.f32 %v500, %v508
    %v511 = vtanh.pop %v510
    %513 = vrot.lane.b32.xlu0 %v511, 64
    %v514 = vpop.permute.xlu0 %513
    %v516 = vmul.f32 %v495, %v514
    %v517 = vlaneseq
    %v518 = vand.u32 %v517, 127
    %vm519 = vcmp.lt.s32.totalorder %v518, 16
    %v522 = vrot.slane %v516, 7
    %523 = vrot.lane.b32.xlu0 %v522, 32
    %v524 = vpop.permute.xlu0 %523
    %v526 = vsel %vm519, %v135, %v524
    %v529 = vsel %vm519, %v190, %v465
    %v532 = vsel %vm519, %v245, %v410
    %v535 = vsel %vm519, %v300, %v355
    %v536 = vsel %vm519, %v355, %v300
    %v537 = vsel %vm519, %v410, %v245
    %v538 = vsel %vm519, %v465, %v190
    %v539 = vsel %vm519, %v524, %v135
    %v541 = vrot.slane %v529, 7
    %v544 = vrot.slane %v532, 6
    %v547 = vrot.slane %v535, 5
    %v550 = vrot.slane %v536, 4
    %v553 = vrot.slane %v537, 3
    %v556 = vrot.slane %v538, 2
    %v559 = vrot.slane %v539, 1
    %vm561 = vcmask 1040384
    %v562 = vsel %vm561, %v526, %v541
    %vm563 = vcmask 1041408
    %v564 = vsel %vm563, %v562, %v544
    %vm565 = vcmask 1042432
    %v566 = vsel %vm565, %v564, %v547
    %vm567 = vcmask 1043456
    %v568 = vsel %vm567, %v566, %v550
    %vm569 = vcmask 1044480
    %v570 = vsel %vm569, %v568, %v553
    %vm571 = vcmask 1045504
    %v572 = vsel %vm571, %v570, %v556
    %vm573 = vcmask 1046528
    %v574 = vsel %vm573, %v572, %v559
    %v575 = vperm.slane %v59, 0
    %v577 = vsel %vm86, %v574, 0
    %579 = vmatpush.msra.mxu0 0.0
    %580 = vmatpush.msra.mxu0 0.0
    %581 = vmatpush.msra.mxu0 0.0
    %582 = vmatpush.msra.mxu0 0.0
    %583 = vmatpush.msra.mxu0 0.0
    %584 = vmatpush.msra.mxu0 0.0
    %585 = vmatpush.msra.mxu0 0.0
    %586 = vmatpush.msra.mxu0 0.0
    %587 = vmatpush.msra.mxu0 0.0
    %588 = vmatpush.msra.mxu0 0.0
    %589 = vmatpush.msra.mxu0 0.0
    %590 = vmatpush.msra.mxu0 0.0
    %591 = vmatpush.msra.mxu0 %v58
    %592 = vmatpush.msra.mxu0 %v57
    %593 = vmatpush.msra.mxu0 %v56
    %594 = vmatpush.msra.mxu0 %v55
    %595 = vmatmul.f32.gmra.mxu0 %v577
    %v596 = vpop.f32.mrf.mxu0
    %v597 = vadd.f32 %v575, %v596
    %598 = vdwg.mxu0
    %599 = vst [vmem:[#allocation7] sm:$0xff] %v597
    // Predicated region
    $region18: #{tpu_custom_call.1} parent=1 // pred_check
      _
    $region19: #{tpu_custom_call.1} parent=1 // pred_check_branch
      %601 = sbr.rel (0) target = $region21
    $region20: #{tpu_custom_call.1} parent=1 // pred_region
      %603 = vsyncadd [#allocation4], 0
      %s605 = sshll.u32 [#allocation7], 4
      %s606 = int_to_ptr.vmem [resolvable:$true] %s605
      %s607 = sshll.u32 %s2, 4
      %s608 = int_to_ptr.hbm [resolvable:$true] %s607
      %610 = dma.vmem_to_hbm [thread:$0]  %s606, 128, %s608, [#allocation4]
    $region21: #{tpu_custom_call.1} parent=1 // pred_fallthru
      _
    // Predicated region
    $region22: #{tpu_custom_call.1} parent=1 // pred_check
      _
    $region23: #{tpu_custom_call.1} parent=1 // pred_check_branch
      %612 = sbr.rel (0) target = $region25
    $region24: #{tpu_custom_call.1} parent=1 // pred_region
      %614 = dma.done [#allocation4], 128
    $region25: #{tpu_custom_call.1} parent=1 // pred_fallthru
      _
    %615 = vsyncpa [#allocation3], 1
    %616 = vsyncpa [#allocation6], 1
    %617 = vsyncpa [#allocation4], 1

</llo_original>
